<compile_context>
chip_gen: v5e
topology: v5e:2x2
jax: 0.10.0
libtpu: 0.0.40
codegen_flags: <defaults>
</compile_context>

<pallas_src>
import functools

import jax
import jax.numpy as jnp
from jax.experimental import pallas as pl
from jax.experimental.pallas import tpu as pltpu

NEG_SLOPE = 0.01  # nn.LeakyReLU default


def _leaky_relu(x):
    return jnp.where(x >= 0, x, NEG_SLOPE * x)


def _round_up(x, m):
    return ((x + m - 1) // m) * m


def dqn_kernel(x_ref, p_ref, o_ref, *, op, w2_off, w3_off, b_off, fp):
    """Fused 3-layer MLP on one (TM, op) batch tile.

    p_ref is the packed parameter slab (R, fp):
      rows [0, op)             : W1  (obs x hidden), zero-padded rows/lanes
      rows [w2_off, w2_off+fp) : W2  (hidden x 2*hidden), zero-padded
      rows [w3_off, w3_off+fp) : W3  (2*hidden x num_actions), zero-padded
      rows [b_off, b_off+3)    : b1, b2, b3 (one row each), zero-padded
    All padding is zeros, so padded lanes of every intermediate stay exactly 0
    (LeakyReLU(0) == 0) and the padded lanes of the output are 0.
    All slices below are static, 8-sublane-aligned views (no VMEM copies).
    """
    x = x_ref[...]                              # (TM, op), padded obs cols = 0

    # Layer 1: Linear(obs -> hidden) + LeakyReLU
    w1 = p_ref[0:op, :]                         # (op, fp)
    b1 = p_ref[b_off + 0:b_off + 1, :]          # (1, fp)
    h = jnp.dot(x, w1, preferred_element_type=jnp.float32) + b1
    h = _leaky_relu(h)                          # (TM, fp), lanes >= hidden are 0

    # Layer 2: Linear(hidden -> 2*hidden) + LeakyReLU
    w2 = p_ref[w2_off:w2_off + fp, :]           # (fp, fp)
    b2 = p_ref[b_off + 1:b_off + 2, :]
    h = jnp.dot(h, w2, preferred_element_type=jnp.float32) + b2
    h = _leaky_relu(h)                          # (TM, fp), lanes >= 2*hidden are 0

    # Layer 3: Linear(2*hidden -> num_actions), lane-dense padded output
    w3 = p_ref[w3_off:w3_off + fp, :]           # (fp, fp)
    b3 = p_ref[b_off + 2:b_off + 3, :]
    out = jnp.dot(h, w3, preferred_element_type=jnp.float32) + b3

    o_ref[...] = out.astype(o_ref.dtype)        # full (TM, fp) unmasked store


def pack_params(params, observation_size, num_actions, hidden_size):
    """Pack w1,b1,w2,b2,w3,b3 into one zero-padded (R, fp) f32 slab."""
    h1, h2, a = hidden_size, 2 * hidden_size, num_actions
    fp = _round_up(max(h1, h2, a), 128)       # common padded feature width
    op = _round_up(observation_size, 8)       # 8-sublane-aligned W1 section
    w2_off = op
    w3_off = op + fp
    b_off = op + 2 * fp
    rows = b_off + 8                          # one 8-row section for the biases

    slab = jnp.zeros((rows, fp), jnp.float32)
    slab = slab.at[0:observation_size, 0:h1].set(params["w1"].astype(jnp.float32))
    slab = slab.at[w2_off:w2_off + h1, 0:h2].set(params["w2"].astype(jnp.float32))
    slab = slab.at[w3_off:w3_off + h2, 0:a].set(params["w3"].astype(jnp.float32))
    slab = slab.at[b_off + 0, 0:h1].set(params["b1"].reshape(-1).astype(jnp.float32))
    slab = slab.at[b_off + 1, 0:h2].set(params["b2"].reshape(-1).astype(jnp.float32))
    slab = slab.at[b_off + 2, 0:a].set(params["b3"].reshape(-1).astype(jnp.float32))

    meta = dict(obs=observation_size, op=op, w2_off=w2_off, w3_off=w3_off,
                b_off=b_off, fp=fp, num_actions=num_actions)
    return slab, meta


def dqn_forward(x, slab, meta, *, block_batch=512):
    """x: (batch, observation_size) f32. Returns (batch, num_actions) f32."""
    batch, obs = x.shape
    fp = meta["fp"]
    op = meta["op"]

    # Zero-pad observation features to the 8-aligned packed width (layout
    # plumbing only: padded columns multiply zero rows of W1).
    if obs < op:
        x = jnp.pad(x, ((0, 0), (0, op - obs)))

    # Batch tile: whole batch if small, otherwise 512-row tiles (weights stay
    # VMEM-resident across grid steps via the constant index_map).
    tm = batch if batch <= block_batch else block_batch
    grid = (pl.cdiv(batch, tm),)

    kernel = functools.partial(
        dqn_kernel, op=op, w2_off=meta["w2_off"], w3_off=meta["w3_off"],
        b_off=meta["b_off"], fp=fp)

    out = pl.pallas_call(
        kernel,
        out_shape=jax.ShapeDtypeStruct((batch, fp), jnp.float32),
        grid=grid,
        in_specs=[
            pl.BlockSpec((tm, op), lambda i: (i, 0)),      # batch tile of x
            pl.BlockSpec(slab.shape, lambda i: (0, 0)),    # resident param slab
        ],
        out_specs=pl.BlockSpec((tm, fp), lambda i: (i, 0)),  # lane-dense output
        compiler_params=pltpu.CompilerParams(
            dimension_semantics=("parallel",)),            # v7x: shard over 2 TCs
    )(x, slab)

    return out[:, :meta["num_actions"]]


def init_params(key, observation_size, num_actions, hidden_size):
    """PyTorch-Linear-style init (uniform +-1/sqrt(fan_in)); W as (in, out)."""
    dims = [
        (observation_size, hidden_size),
        (hidden_size, 2 * hidden_size),
        (2 * hidden_size, num_actions),
    ]
    params = {}
    keys = jax.random.split(key, 2 * len(dims))
    for i, (fan_in, fan_out) in enumerate(dims):
        bound = 1.0 / (fan_in ** 0.5)
        params[f"w{i+1}"] = jax.random.uniform(
            keys[2 * i], (fan_in, fan_out), jnp.float32, -bound, bound)
        params[f"b{i+1}"] = jax.random.uniform(
            keys[2 * i + 1], (fan_out,), jnp.float32, -bound, bound)
    return params


def dqn_reference(x, params):
    """Pure-JAX reference of the same forward pass."""
    h1 = _leaky_relu(x @ params["w1"] + params["b1"])
    h2 = _leaky_relu(h1 @ params["w2"] + params["b2"])
    return h2 @ params["w3"] + params["b3"]


if __name__ == "__main__":
    # CartPole-like sizes: observation_size=4, num_actions=2, hidden_size=32.
    observation_size, num_actions, hidden_size = 4, 2, 32
    batch = 8

    key = jax.random.PRNGKey(0)
    pkey, xkey = jax.random.split(key)
    params = init_params(pkey, observation_size, num_actions, hidden_size)
    x = jax.random.normal(xkey, (batch, observation_size), jnp.float32)

    slab, meta = pack_params(params, observation_size, num_actions, hidden_size)

    out = dqn_forward(x, slab, meta)
    out = jax.block_until_ready(out)

    ref = dqn_reference(x, params)
    assert out.shape == (batch, num_actions)
    assert jnp.allclose(out, ref, atol=1e-5, rtol=1e-5)

    # TODO(synk): backward()/MSELoss/Adam training step not implemented — only
    # the inference forward pass (torch.no_grad path) is translated to Pallas.
    print("KERNEL_OK")
</pallas_src>

<mosaic_0001>
module attributes {stable_mosaic.version = 11 : i64} {
  func.func @dqn_kernel(%arg0: i32, %arg1: memref<8x8xf32, #tpu.memory_space<vmem>>, %arg2: memref<272x128xf32, #tpu.memory_space<vmem>>, %arg3: memref<8x128xf32, #tpu.memory_space<vmem>>) attributes {dimension_semantics = [#tpu.dimension_semantics<parallel>], iteration_bounds = array<i64: 1>, scalar_prefetch = 0 : i64, scratch_operands = 0 : i64, tpu.core_type = #tpu.core_type<tc>, window_params = [{transform_indices = @transform_0, window_bounds = array<i64: 8, 8>}, {pipeline_mode = #tpu.pipeline_mode<synchronous>, transform_indices = @transform_1, window_bounds = array<i64: 272, 128>}, {transform_indices = @transform_2, window_bounds = array<i64: 8, 128>}]} {
    %c0 = arith.constant 0 : index
    %c0_0 = arith.constant 0 : index
    %0 = vector.load %arg1[%c0, %c0_0] : memref<8x8xf32, #tpu.memory_space<vmem>>, vector<8x8xf32>
    %c0_1 = arith.constant 0 : index
    %c0_2 = arith.constant 0 : index
    %1 = vector.load %arg2[%c0_1, %c0_2] : memref<272x128xf32, #tpu.memory_space<vmem>>, vector<8x128xf32>
    %c264 = arith.constant 264 : index
    %c0_3 = arith.constant 0 : index
    %2 = vector.load %arg2[%c264, %c0_3] : memref<272x128xf32, #tpu.memory_space<vmem>>, vector<1x128xf32>
    %cst = arith.constant dense<0.000000e+00> : vector<8x128xf32>
    %3 = tpu.matmul %0, %1, %cst {dimension_numbers = #tpu.dot_dimension_numbers<[1], [0], [0], [1], [0, 0, 1, 1], [], []>} : vector<8x8xf32>, vector<8x128xf32>, vector<8x128xf32> -> vector<8x128xf32>
    %4 = vector.broadcast %2 : vector<1x128xf32> to vector<8x128xf32>
    %5 = arith.addf %3, %4 : vector<8x128xf32>
    %cst_4 = arith.constant 0.000000e+00 : f32
    %6 = vector.broadcast %cst_4 : f32 to vector<8x128xf32>
    %7 = arith.cmpf oge, %5, %6 : vector<8x128xf32>
    %cst_5 = arith.constant 0.00999999977 : f32
    %8 = vector.broadcast %cst_5 : f32 to vector<8x128xf32>
    %9 = arith.mulf %8, %5 : vector<8x128xf32>
    %10 = arith.select %7, %5, %9 : vector<8x128xi1>, vector<8x128xf32>
    %c8 = arith.constant 8 : index
    %c0_6 = arith.constant 0 : index
    %11 = vector.load %arg2[%c8, %c0_6] : memref<272x128xf32, #tpu.memory_space<vmem>>, vector<128x128xf32>
    %c265 = arith.constant 265 : index
    %c0_7 = arith.constant 0 : index
    %12 = vector.load %arg2[%c265, %c0_7] : memref<272x128xf32, #tpu.memory_space<vmem>>, vector<1x128xf32>
    %cst_8 = arith.constant dense<0.000000e+00> : vector<8x128xf32>
    %13 = tpu.matmul %10, %11, %cst_8 {dimension_numbers = #tpu.dot_dimension_numbers<[1], [0], [0], [1], [0, 0, 1, 1], [], []>} : vector<8x128xf32>, vector<128x128xf32>, vector<8x128xf32> -> vector<8x128xf32>
    %14 = vector.broadcast %12 : vector<1x128xf32> to vector<8x128xf32>
    %15 = arith.addf %13, %14 : vector<8x128xf32>
    %cst_9 = arith.constant 0.000000e+00 : f32
    %16 = vector.broadcast %cst_9 : f32 to vector<8x128xf32>
    %17 = arith.cmpf oge, %15, %16 : vector<8x128xf32>
    %cst_10 = arith.constant 0.00999999977 : f32
    %18 = vector.broadcast %cst_10 : f32 to vector<8x128xf32>
    %19 = arith.mulf %18, %15 : vector<8x128xf32>
    %20 = arith.select %17, %15, %19 : vector<8x128xi1>, vector<8x128xf32>
    %c136 = arith.constant 136 : index
    %c0_11 = arith.constant 0 : index
    %21 = vector.load %arg2[%c136, %c0_11] : memref<272x128xf32, #tpu.memory_space<vmem>>, vector<128x128xf32>
    %c266 = arith.constant 266 : index
    %c0_12 = arith.constant 0 : index
    %22 = vector.load %arg2[%c266, %c0_12] : memref<272x128xf32, #tpu.memory_space<vmem>>, vector<1x128xf32>
    %cst_13 = arith.constant dense<0.000000e+00> : vector<8x128xf32>
    %23 = tpu.matmul %20, %21, %cst_13 {dimension_numbers = #tpu.dot_dimension_numbers<[1], [0], [0], [1], [0, 0, 1, 1], [], []>} : vector<8x128xf32>, vector<128x128xf32>, vector<8x128xf32> -> vector<8x128xf32>
    %24 = vector.broadcast %22 : vector<1x128xf32> to vector<8x128xf32>
    %25 = arith.addf %23, %24 : vector<8x128xf32>
    %c0_14 = arith.constant 0 : index
    %c0_15 = arith.constant 0 : index
    %26 = vector.load %arg3[%c0_14, %c0_15] : memref<8x128xf32, #tpu.memory_space<vmem>>, vector<8x128xf32>
    tpu.vector_store %arg3[%c0_14, %c0_15], %25 {strides = array<i32>} : memref<8x128xf32, #tpu.memory_space<vmem>>, vector<8x128xf32>,
    return
  }
  func.func @transform_0(%arg0: i32) -> (i32, i32) {
    %c0_i32 = arith.constant 0 : i32
    %c0_i32_0 = arith.constant 0 : i32
    return %arg0, %c0_i32 : i32, i32
  }
  func.func @transform_1(%arg0: i32) -> (i32, i32) {
    %c0_i32 = arith.constant 0 : i32
    %c0_i32_0 = arith.constant 0 : i32
    %c0_i32_1 = arith.constant 0 : i32
    return %c0_i32, %c0_i32_0 : i32, i32
  }
  func.func @transform_2(%arg0: i32) -> (i32, i32) {
    %c0_i32 = arith.constant 0 : i32
    %c0_i32_0 = arith.constant 0 : i32
    return %arg0, %c0_i32 : i32, i32
  }
}

</mosaic_0001>

<llo_original>
// kernel: tpu_custom_call.1
$region0: #{tpu_custom_call.1}
  #allocation0 [shape = 'u32[]', space=smem, size = 0x4, offset = 0x4, fixed_abs, tag = 'smem constant byte address 0x4 - core index']
  #allocation1 [shape = 'u32[72,128]{1,0:T(1,128)}', space=vmem, size = 0x9000, scoped, tag = 'internal scratch']
  %s0 = inlined_call_operand.hbm [shape: f32[8,8], index: 0, kind: input, shape index: {}]
  %s1 = inlined_call_operand.hbm [shape: f32[272,128], index: 1, kind: input, shape index: {}]
  %s2 = inlined_call_operand.hbm [shape: f32[8,128], index: 2, kind: output, shape index: {}]
  %s3 = sld [smem:[#allocation0]]
  $region26: #{tpu_custom_call.1} parent=0
    _
  %s5 = ssub.s32 1, %s3
  %s6 = scalar_select 0, %s5, %s3
  $region1: #{tpu_custom_call.1} parent=0
    #allocation2 [shape = 'u8[4096]{0}', space=vmem, size = 0x1000, scoped, tag = 'input window, operand 0, single buffered']
    #allocation3 [shape = 's32[1]{0}', space=sflag, size = 0x4, scoped, tag = 'scoped memory for tpu_custom_call.1']
    #allocation4 [shape = 's32[1]{0}', space=sflag, size = 0x4, scoped, tag = 'scoped memory for tpu_custom_call.1']
    #allocation5 [shape = 'u8[139264]{0}', space=vmem, size = 0x22000, scoped, tag = 'input window, operand 1, single buffered']
    #allocation6 [shape = 's32[1]{0}', space=sflag, size = 0x4, scoped, tag = 'scoped memory for tpu_custom_call.1']
    #allocation7 [shape = 'u8[4096]{0}', space=vmem, size = 0x1000, scoped, tag = 'output window, operand 0, single buffered']
    %7 = vsyncpa [#allocation3], 0
    %8 = vsyncpa [#allocation6], 0
    %9 = vsyncpa [#allocation4], 0
    // Predicated region
    $region2: #{tpu_custom_call.1} parent=1 // pred_check
      _
    $region3: #{tpu_custom_call.1} parent=1 // pred_check_branch
      %11 = sbr.rel (0) target = $region5
    $region4: #{tpu_custom_call.1} parent=1 // pred_region
      %13 = vsyncadd [#allocation3], 0
      %s15 = sshll.u32 %s0, 4
      %s16 = int_to_ptr.hbm [resolvable:$true] %s15
      %s17 = sshll.u32 [#allocation2], 4
      %s18 = int_to_ptr.vmem [resolvable:$true] %s17
      %20 = dma.hbm_to_vmem [thread:$0]  %s16, 128, %s18, [#allocation3]
    $region5: #{tpu_custom_call.1} parent=1 // pred_fallthru
      _
    // Predicated region
    $region6: #{tpu_custom_call.1} parent=1 // pred_check
      _
    $region7: #{tpu_custom_call.1} parent=1 // pred_check_branch
      %22 = sbr.rel (0) target = $region9
    $region8: #{tpu_custom_call.1} parent=1 // pred_region
      %24 = vsyncadd [#allocation6], 0
      %s25 = sshll.u32 %s1, 4
      %s26 = int_to_ptr.hbm [resolvable:$true] %s25
      %s27 = sshll.u32 [#allocation5], 4
      %s28 = int_to_ptr.vmem [resolvable:$true] %s27
      %33 = dma.hbm_to_vmem [thread:$0]  %s26, 4352, %s28, [#allocation6], 128, 128, 8
    $region9: #{tpu_custom_call.1} parent=1 // pred_fallthru
      _
    // Predicated region
    $region10: #{tpu_custom_call.1} parent=1 // pred_check
      _
    $region11: #{tpu_custom_call.1} parent=1 // pred_check_branch
      %35 = sbr.rel (0) target = $region13
    $region12: #{tpu_custom_call.1} parent=1 // pred_region
      %37 = dma.done [#allocation3], 128
    $region13: #{tpu_custom_call.1} parent=1 // pred_fallthru
      _
    // Predicated region
    $region14: #{tpu_custom_call.1} parent=1 // pred_check
      _
    $region15: #{tpu_custom_call.1} parent=1 // pred_check_branch
      %39 = sbr.rel (0) target = $region17
    $region16: #{tpu_custom_call.1} parent=1 // pred_region
      %41 = dma.done [#allocation6], 4352
    $region17: #{tpu_custom_call.1} parent=1 // pred_fallthru
      _
    %v42 = vld [vmem:[#allocation2] sm:$0xff]
    %v43 = vld [vmem:[#allocation5] sm:$0xff]
    %v44 = vld [vmem:[#allocation5 + $0x108] sm:$0x1]
    %v45 = vperm.slane %v44, 0
    %vm46 = vcmask 64512
    %v48 = vsel %vm46, %v42, 0
    %50 = vmatpush.msra.mxu0 0.0
    %51 = vmatpush.msra.mxu0 0.0
    %52 = vmatpush.msra.mxu0 0.0
    %53 = vmatpush.msra.mxu0 0.0
    %54 = vmatpush.msra.mxu0 0.0
    %55 = vmatpush.msra.mxu0 0.0
    %56 = vmatpush.msra.mxu0 0.0
    %57 = vmatpush.msra.mxu0 0.0
    %58 = vmatpush.msra.mxu0 0.0
    %59 = vmatpush.msra.mxu0 0.0
    %60 = vmatpush.msra.mxu0 0.0
    %61 = vmatpush.msra.mxu0 0.0
    %62 = vmatpush.msra.mxu0 0.0
    %63 = vmatpush.msra.mxu0 0.0
    %64 = vmatpush.msra.mxu0 0.0
    %65 = vmatpush.msra.mxu0 %v43
    %66 = vmatmul.f32.gmra.mxu0 %v48
    %v67 = vpop.f32.mrf.mxu0
    %v68 = vadd.f32 %v45, %v67
    %69 = vdwg.mxu0
    %vm70 = vcmp.ge.f32.partialorder %v68, 0.0
    %v71 = vmul.f32 %v68, 0.01
    %v72 = vsel %vm70, %v68, %v71
    %v73 = vld [vmem:[#allocation5 + $0x8] sm:$0xff]
    %v74 = vld [vmem:[#allocation5 + $0x10] sm:$0xff]
    %v75 = vld [vmem:[#allocation5 + $0x18] sm:$0xff]
    %v76 = vld [vmem:[#allocation5 + $0x20] sm:$0xff]
    %v77 = vld [vmem:[#allocation5 + $0x28] sm:$0xff]
    %v78 = vld [vmem:[#allocation5 + $0x30] sm:$0xff]
    %v79 = vld [vmem:[#allocation5 + $0x38] sm:$0xff]
    %v80 = vld [vmem:[#allocation5 + $0x40] sm:$0xff]
    %v81 = vld [vmem:[#allocation5 + $0x48] sm:$0xff]
    %v82 = vld [vmem:[#allocation5 + $0x50] sm:$0xff]
    %v83 = vld [vmem:[#allocation5 + $0x58] sm:$0xff]
    %v84 = vld [vmem:[#allocation5 + $0x60] sm:$0xff]
    %v85 = vld [vmem:[#allocation5 + $0x68] sm:$0xff]
    %v86 = vld [vmem:[#allocation5 + $0x70] sm:$0xff]
    %v87 = vld [vmem:[#allocation5 + $0x78] sm:$0xff]
    %v88 = vld [vmem:[#allocation5 + $0x80] sm:$0xff]
    %v89 = vld [vmem:[#allocation5 + $0x109] sm:$0x1]
    %v90 = vperm.slane %v89, 0
    %91 = vmatpush.msra.mxu0 %v88
    %92 = vmatpush.msra.mxu0 %v87
    %93 = vmatpush.msra.mxu0 %v86
    %94 = vmatpush.msra.mxu0 %v85
    %95 = vmatpush.msra.mxu0 %v84
    %96 = vmatpush.msra.mxu0 %v83
    %97 = vmatpush.msra.mxu0 %v82
    %98 = vmatpush.msra.mxu0 %v81
    %99 = vmatpush.msra.mxu0 %v80
    %100 = vmatpush.msra.mxu0 %v79
    %101 = vmatpush.msra.mxu0 %v78
    %102 = vmatpush.msra.mxu0 %v77
    %103 = vmatpush.msra.mxu0 %v76
    %104 = vmatpush.msra.mxu0 %v75
    %105 = vmatpush.msra.mxu0 %v74
    %106 = vmatpush.msra.mxu0 %v73
    %107 = vmatmul.f32.gmra.mxu0 %v72
    %v108 = vpop.f32.mrf.mxu0
    %v109 = vadd.f32 %v90, %v108
    %110 = vdwg.mxu0
    %vm111 = vcmp.ge.f32.partialorder %v109, 0.0
    %v112 = vmul.f32 %v109, 0.01
    %v113 = vsel %vm111, %v109, %v112
    %v114 = vld [vmem:[#allocation5 + $0x88] sm:$0xff]
    %v115 = vld [vmem:[#allocation5 + $0x90] sm:$0xff]
    %v116 = vld [vmem:[#allocation5 + $0x98] sm:$0xff]
    %v117 = vld [vmem:[#allocation5 + $0xa0] sm:$0xff]
    %v118 = vld [vmem:[#allocation5 + $0xa8] sm:$0xff]
    %v119 = vld [vmem:[#allocation5 + $0xb0] sm:$0xff]
    %v120 = vld [vmem:[#allocation5 + $0xb8] sm:$0xff]
    %v121 = vld [vmem:[#allocation5 + $0xc0] sm:$0xff]
    %v122 = vld [vmem:[#allocation5 + $0xc8] sm:$0xff]
    %v123 = vld [vmem:[#allocation5 + $0xd0] sm:$0xff]
    %v124 = vld [vmem:[#allocation5 + $0xd8] sm:$0xff]
    %v125 = vld [vmem:[#allocation5 + $0xe0] sm:$0xff]
    %v126 = vld [vmem:[#allocation5 + $0xe8] sm:$0xff]
    %v127 = vld [vmem:[#allocation5 + $0xf0] sm:$0xff]
    %v128 = vld [vmem:[#allocation5 + $0xf8] sm:$0xff]
    %v129 = vld [vmem:[#allocation5 + $0x100] sm:$0xff]
    %v130 = vld [vmem:[#allocation5 + $0x10a] sm:$0x1]
    %v131 = vperm.slane %v130, 0
    %132 = vmatpush.msra.mxu0 %v129
    %133 = vmatpush.msra.mxu0 %v128
    %134 = vmatpush.msra.mxu0 %v127
    %135 = vmatpush.msra.mxu0 %v126
    %136 = vmatpush.msra.mxu0 %v125
    %137 = vmatpush.msra.mxu0 %v124
    %138 = vmatpush.msra.mxu0 %v123
    %139 = vmatpush.msra.mxu0 %v122
    %140 = vmatpush.msra.mxu0 %v121
    %141 = vmatpush.msra.mxu0 %v120
    %142 = vmatpush.msra.mxu0 %v119
    %143 = vmatpush.msra.mxu0 %v118
    %144 = vmatpush.msra.mxu0 %v117
    %145 = vmatpush.msra.mxu0 %v116
    %146 = vmatpush.msra.mxu0 %v115
    %147 = vmatpush.msra.mxu0 %v114
    %148 = vmatmul.f32.gmra.mxu0 %v113
    %v149 = vpop.f32.mrf.mxu0
    %v150 = vadd.f32 %v131, %v149
    %151 = vdwg.mxu0
    %152 = vst [vmem:[#allocation7] sm:$0xff] %v150
    // Predicated region
    $region18: #{tpu_custom_call.1} parent=1 // pred_check
      _
    $region19: #{tpu_custom_call.1} parent=1 // pred_check_branch
      %154 = sbr.rel (0) target = $region21
    $region20: #{tpu_custom_call.1} parent=1 // pred_region
      %156 = vsyncadd [#allocation4], 0
      %s158 = sshll.u32 [#allocation7], 4
      %s159 = int_to_ptr.vmem [resolvable:$true] %s158
      %s160 = sshll.u32 %s2, 4
      %s161 = int_to_ptr.hbm [resolvable:$true] %s160
      %163 = dma.vmem_to_hbm [thread:$0]  %s159, 128, %s161, [#allocation4]
    $region21: #{tpu_custom_call.1} parent=1 // pred_fallthru
      _
    // Predicated region
    $region22: #{tpu_custom_call.1} parent=1 // pred_check
      _
    $region23: #{tpu_custom_call.1} parent=1 // pred_check_branch
      %165 = sbr.rel (0) target = $region25
    $region24: #{tpu_custom_call.1} parent=1 // pred_region
      %167 = dma.done [#allocation4], 128
    $region25: #{tpu_custom_call.1} parent=1 // pred_fallthru
      _
    %168 = vsyncpa [#allocation3], 1
    %169 = vsyncpa [#allocation6], 1
    %170 = vsyncpa [#allocation4], 1

</llo_original>
